<compile_context>
chip_gen: v7x
topology: tpu7x:2x2x1
jax: 0.10.0
libtpu: 0.0.40
codegen_flags: <defaults>
</compile_context>

<pallas_src>
import jax
import jax.numpy as jnp
from jax import lax
from jax.experimental import pallas as pl
from jax.experimental.pallas import tpu as pltpu

EMB_DIM = 32          # projection_layer_output_dim
FEAT_DIM = 8          # embedding_to_features output dim
VOCAB = 128           # small synthetic vocab (t5-small real vocab = 32128)
LANES = 128           # TPU lane width
PACK = LANES // FEAT_DIM            # 16 examples packed per 128-lane row
PACKED_IN = PACK * EMB_DIM          # 512 input features per packed row

# Examples per grid step (= 512 packed rows).  See header comment for VMEM math.
DEFAULT_TILE_EXAMPLES = 8192


# ---------------------------------------------------------------------------
# Kernels
# ---------------------------------------------------------------------------
def _round3(y):
    # torch/numpy .round(3): round-half-to-even at 3 decimals (f32 approx).
    return jnp.round(y * 1000.0) / 1000.0


def _prompt_tile(x, w1, b1):
    # x:[T,512] (16 examples/row)  w1:[512,128] block-diagonal  b1:[1,128]
    # -> [T,128]; lanes 8e..8e+7 hold example e's rounded features.
    y = jnp.dot(x, w1, preferred_element_type=jnp.float32) + b1
    return _round3(y)


def _store_token_ids(prompt, w2_ref, b2_ref, o_ids_ref):
    # prompt:[T,128] packed features; w2_ref:[128, PACK*VOCAB] block-diagonal;
    # b2_ref:[1,VOCAB].  For each of the 16 packed example slots, compute its
    # 128 logits with a 128-aligned lane slice of w2 (K=128 MXU matmul; the
    # zero rows are wasted MXU flops but MXU is nowhere near saturation) and
    # take a first-occurrence argmax built from max/iota/where/min (all plain
    # lane ops).  Ids land in a dense [T, 16] int32 block: exactly 4 HBM bytes
    # per example (the lane-partial store is ~3% of tile traffic, negligible).
    b2 = b2_ref[...]
    for e in range(PACK):
        logits_e = jnp.dot(prompt, w2_ref[:, e * VOCAB:(e + 1) * VOCAB],
                           preferred_element_type=jnp.float32) + b2
        m = jnp.max(logits_e, axis=-1, keepdims=True)
        vidx = lax.broadcasted_iota(jnp.int32, logits_e.shape, 1).astype(jnp.float32)
        ids_e = jnp.min(jnp.where(logits_e >= m, vidx, float(VOCAB)),
                        axis=-1, keepdims=True)
        o_ids_ref[:, e:e + 1] = ids_e.astype(jnp.int32)


def _prompt_kernel(x_ref, w1_ref, b1_ref, o_ref):
    o_ref[...] = _prompt_tile(x_ref[...], w1_ref[...], b1_ref[...])


def _fused_kernel(x_ref, w1_ref, b1_ref, w2_ref, b2_ref, o_prompt_ref, o_ids_ref):
    prompt = _prompt_tile(x_ref[...], w1_ref[...], b1_ref[...])
    o_prompt_ref[...] = prompt
    _store_token_ids(prompt, w2_ref, b2_ref, o_ids_ref)


def _ids_only_kernel(x_ref, w1_ref, b1_ref, w2_ref, b2_ref, o_ids_ref):
    # Decode-only path: skip the prompt writeback entirely.
    prompt = _prompt_tile(x_ref[...], w1_ref[...], b1_ref[...])
    _store_token_ids(prompt, w2_ref, b2_ref, o_ids_ref)


# ---------------------------------------------------------------------------
# Wrappers (grid over packed rows, weights resident, partial boundary block)
# ---------------------------------------------------------------------------
def _round_up(x, m):
    return (x + m - 1) // m * m


def _pack_rows(embeds):
    """[N,32] -> ([R,512] packed rows, N, N_pad).  Pads only to a multiple of 16."""
    n = embeds.shape[0]
    n_pad = _round_up(n, PACK)
    x = embeds if n_pad == n else jnp.pad(embeds, ((0, n_pad - n), (0, 0)))
    return x.reshape(n_pad // PACK, PACKED_IN), n, n_pad


def _pick_tile_r(num_rows, tile_examples):
    want = max(1, tile_examples // PACK)
    if num_rows <= want:
        return num_rows                 # single block == full row extent
    return max(8, (want // 8) * 8)      # sublane-aligned; boundary block is partial


def _common_specs(tile_r):
    x_spec = pl.BlockSpec((tile_r, PACKED_IN), lambda i: (i, 0))
    w1_spec = pl.BlockSpec((PACKED_IN, LANES), lambda i: (0, 0))   # resident
    b1_spec = pl.BlockSpec((1, LANES), lambda i: (0, 0))           # resident
    return x_spec, w1_spec, b1_spec


def embedding_to_prompt(embeds, packed, tile_examples=DEFAULT_TILE_EXAMPLES):
    """embeds:[N, EMB_DIM] f32 -> rounded features [N, FEAT_DIM] f32."""
    xp, n, n_pad = _pack_rows(embeds)
    rows = xp.shape[0]
    tile_r = _pick_tile_r(rows, tile_examples)
    x_spec, w1_spec, b1_spec = _common_specs(tile_r)
    out = pl.pallas_call(
        _prompt_kernel,
        out_shape=jax.ShapeDtypeStruct((rows, LANES), jnp.float32),
        grid=(pl.cdiv(rows, tile_r),),
        in_specs=[x_spec, w1_spec, b1_spec],
        out_specs=pl.BlockSpec((tile_r, LANES), lambda i: (i, 0)),
        compiler_params=pltpu.CompilerParams(dimension_semantics=("parallel",)),
    )(xp, packed["w1_blk"], packed["b1_tiled"])
    return out.reshape(n_pad, FEAT_DIM)[:n]


def prompt_and_token_ids(embeds, packed, tile_examples=DEFAULT_TILE_EXAMPLES):
    """Fused: rounded features [N, FEAT_DIM] + EmbeddingToLogits token ids [N]."""
    xp, n, n_pad = _pack_rows(embeds)
    rows = xp.shape[0]
    tile_r = _pick_tile_r(rows, tile_examples)
    x_spec, w1_spec, b1_spec = _common_specs(tile_r)
    prompt_pad, ids_pad = pl.pallas_call(
        _fused_kernel,
        out_shape=(jax.ShapeDtypeStruct((rows, LANES), jnp.float32),
                   jax.ShapeDtypeStruct((rows, PACK), jnp.int32)),
        grid=(pl.cdiv(rows, tile_r),),
        in_specs=[x_spec, w1_spec, b1_spec,
                  pl.BlockSpec((LANES, PACK * VOCAB), lambda i: (0, 0)),  # resident
                  pl.BlockSpec((1, VOCAB), lambda i: (0, 0))],            # resident
        out_specs=(pl.BlockSpec((tile_r, LANES), lambda i: (i, 0)),
                   pl.BlockSpec((tile_r, PACK), lambda i: (i, 0))),
        compiler_params=pltpu.CompilerParams(dimension_semantics=("parallel",)),
    )(xp, packed["w1_blk"], packed["b1_tiled"], packed["w2_blk"], packed["b2"])
    prompts = prompt_pad.reshape(n_pad, FEAT_DIM)[:n]
    ids = ids_pad.reshape(-1)[:n]
    return prompts, ids


def token_ids(embeds, packed, tile_examples=DEFAULT_TILE_EXAMPLES):
    """Decode-only path: token ids [N] with no prompt writeback."""
    xp, n, n_pad = _pack_rows(embeds)
    rows = xp.shape[0]
    tile_r = _pick_tile_r(rows, tile_examples)
    x_spec, w1_spec, b1_spec = _common_specs(tile_r)
    ids_pad = pl.pallas_call(
        _ids_only_kernel,
        out_shape=jax.ShapeDtypeStruct((rows, PACK), jnp.int32),
        grid=(pl.cdiv(rows, tile_r),),
        in_specs=[x_spec, w1_spec, b1_spec,
                  pl.BlockSpec((LANES, PACK * VOCAB), lambda i: (0, 0)),
                  pl.BlockSpec((1, VOCAB), lambda i: (0, 0))],
        out_specs=pl.BlockSpec((tile_r, PACK), lambda i: (i, 0)),
        compiler_params=pltpu.CompilerParams(dimension_semantics=("parallel",)),
    )(xp, packed["w1_blk"], packed["b1_tiled"], packed["w2_blk"], packed["b2"])
    return ids_pad.reshape(-1)[:n]


def t5_decoder_forward(embeds, packed, tile_examples=DEFAULT_TILE_EXAMPLES):
    """Forward path: returns the rounded feature prompts [N, FEAT_DIM]."""
    # TODO(synk): tokenizer.decode / T5ForConditionalGeneration text generation
    # are string / pretrained-LLM ops with no Pallas equivalent.
    return embedding_to_prompt(embeds, packed, tile_examples=tile_examples)


# ---------------------------------------------------------------------------
# Parameters (torch-layout init + one-time block-diagonal packing)
# ---------------------------------------------------------------------------
def init_params(key):
    k1, k2, k3, k4 = jax.random.split(key, 4)
    # nn.Linear default init: U(-1/sqrt(fan_in), 1/sqrt(fan_in))
    lim1 = 1.0 / jnp.sqrt(jnp.float32(EMB_DIM))
    lim2 = 1.0 / jnp.sqrt(jnp.float32(FEAT_DIM))
    return {
        "feat_w": jax.random.uniform(k1, (FEAT_DIM, EMB_DIM), jnp.float32, -lim1, lim1),
        "feat_b": jax.random.uniform(k2, (FEAT_DIM,), jnp.float32, -lim1, lim1),
        "logit_w": jax.random.uniform(k3, (VOCAB, FEAT_DIM), jnp.float32, -lim2, lim2),
        "logit_b": jax.random.uniform(k4, (VOCAB,), jnp.float32, -lim2, lim2),
    }


def pack_params(tp):
    """One-time layout fix: block-diagonal weights for the 16-example packing."""
    w1_blk = jnp.zeros((PACKED_IN, LANES), jnp.float32)
    w2_blk = jnp.zeros((LANES, PACK * VOCAB), jnp.float32)
    for e in range(PACK):
        w1_blk = w1_blk.at[e * EMB_DIM:(e + 1) * EMB_DIM,
                           e * FEAT_DIM:(e + 1) * FEAT_DIM].set(tp["feat_w"].T)
        w2_blk = w2_blk.at[e * FEAT_DIM:(e + 1) * FEAT_DIM,
                           e * VOCAB:(e + 1) * VOCAB].set(tp["logit_w"].T)
    b1_tiled = jnp.tile(tp["feat_b"], PACK).reshape(1, LANES)
    b2 = tp["logit_b"].reshape(1, VOCAB)
    return {"w1_blk": w1_blk, "b1_tiled": b1_tiled, "w2_blk": w2_blk, "b2": b2}


# ---------------------------------------------------------------------------
# Demo / correctness check
# ---------------------------------------------------------------------------
if __name__ == "__main__":
    key = jax.random.PRNGKey(0)
    kp, kx = jax.random.split(key)
    torch_params = init_params(kp)
    packed = pack_params(torch_params)

    # 300 examples, 128-example tiles: exercises padding to 16, a 3-step grid
    # and a partial boundary block (19 packed rows, blocks of 8).
    batch = 300
    embeds = jax.random.normal(kx, (batch, EMB_DIM), jnp.float32)

    # Forward path: Linear(32->8) + round(3) in Pallas.
    prompts = t5_decoder_forward(embeds, packed, tile_examples=128)
    prompts = jax.block_until_ready(prompts)
    assert prompts.shape == (batch, FEAT_DIM)

    # Reference.  Note: .round(3) quantizes at 1e-3, so values within a few
    # ulps of a 0.0005 boundary may legally land on either side depending on
    # MXU summation order/precision — compare against the *unrounded* linear
    # output with a sub-millidecimal-scale tolerance instead of bit parity.
    lin_ref = jnp.dot(embeds, torch_params["feat_w"].T,
                      precision=jax.lax.Precision.HIGHEST) + torch_params["feat_b"]
    ref_prompt = jnp.round(lin_ref * 1000.0) / 1000.0
    assert float(jnp.max(jnp.abs(prompts - lin_ref))) < 2.5e-3, "linear+round mismatch"

    # Fused dependent-class path: prompts + EmbeddingToLogits argmax.
    prompts2, ids = prompt_and_token_ids(embeds, packed, tile_examples=128)
    prompts2, ids = jax.block_until_ready((prompts2, ids))
    assert prompts2.shape == (batch, FEAT_DIM) and ids.shape == (batch,)
    assert jnp.allclose(prompts2, prompts, atol=2e-3), "fused prompt mismatch"

    # Decode-only variant (skips prompt writeback) must agree with the fused one.
    ids_only = jax.block_until_ready(token_ids(embeds, packed, tile_examples=128))
    assert jnp.array_equal(ids, ids_only), "ids-only variant mismatch"

    ref_logits = ref_prompt @ torch_params["logit_w"].T + torch_params["logit_b"]
    picked = jnp.take_along_axis(ref_logits, ids[:, None], axis=-1)[:, 0]
    # Tolerant argmax check (rounding flips + MXU summation order can perturb
    # near-ties); a wrong argmax would typically be O(0.5) below the max.
    assert bool(jnp.all(picked >= ref_logits.max(axis=-1) - 2e-2)), "argmax mismatch"
    assert bool(jnp.all((ids >= 0) & (ids < VOCAB))), "token id out of range"

    print("KERNEL_OK")
</pallas_src>

<mosaic_0001>
module attributes {stable_mosaic.version = 11 : i64} {
  func.func @_prompt_kernel(%arg0: i32, %arg1: memref<8x512xf32, #tpu.memory_space<vmem>>, %arg2: memref<512x128xf32, #tpu.memory_space<vmem>>, %arg3: memref<1x128xf32, #tpu.memory_space<vmem>>, %arg4: memref<8x128xf32, #tpu.memory_space<vmem>>) attributes {dimension_semantics = [#tpu.dimension_semantics<parallel>], iteration_bounds = array<i64: 3>, scalar_prefetch = 0 : i64, scratch_operands = 0 : i64, tpu.core_type = #tpu.core_type<tc>, window_params = [{transform_indices = @transform_0, window_bounds = array<i64: 8, 512>}, {pipeline_mode = #tpu.pipeline_mode<synchronous>, transform_indices = @transform_1, window_bounds = array<i64: 512, 128>}, {pipeline_mode = #tpu.pipeline_mode<synchronous>, transform_indices = @transform_2, window_bounds = array<i64: 1, 128>}, {transform_indices = @transform_3, window_bounds = array<i64: 8, 128>}]} {
    %c0 = arith.constant 0 : index
    %c0_0 = arith.constant 0 : index
    %0 = vector.load %arg1[%c0, %c0_0] : memref<8x512xf32, #tpu.memory_space<vmem>>, vector<8x512xf32>
    %c0_1 = arith.constant 0 : index
    %c0_2 = arith.constant 0 : index
    %1 = vector.load %arg2[%c0_1, %c0_2] : memref<512x128xf32, #tpu.memory_space<vmem>>, vector<512x128xf32>
    %c0_3 = arith.constant 0 : index
    %c0_4 = arith.constant 0 : index
    %2 = vector.load %arg3[%c0_3, %c0_4] : memref<1x128xf32, #tpu.memory_space<vmem>>, vector<1x128xf32>
    %cst = arith.constant dense<0.000000e+00> : vector<8x128xf32>
    %3 = tpu.matmul %0, %1, %cst {dimension_numbers = #tpu.dot_dimension_numbers<[1], [0], [0], [1], [0, 0, 1, 1], [], []>} : vector<8x512xf32>, vector<512x128xf32>, vector<8x128xf32> -> vector<8x128xf32>
    %4 = vector.broadcast %2 : vector<1x128xf32> to vector<8x128xf32>
    %5 = arith.addf %3, %4 : vector<8x128xf32>
    %cst_5 = arith.constant 1.000000e+03 : f32
    %6 = vector.broadcast %cst_5 : f32 to vector<8x128xf32>
    %7 = arith.mulf %5, %6 : vector<8x128xf32>
    %8 = math.roundeven %7 : vector<8x128xf32>
    %cst_6 = arith.constant 1.000000e+03 : f32
    %9 = vector.broadcast %cst_6 : f32 to vector<8x128xf32>
    %10 = arith.divf %8, %9 : vector<8x128xf32>
    %c0_7 = arith.constant 0 : index
    %c0_8 = arith.constant 0 : index
    %11 = vector.load %arg4[%c0_7, %c0_8] : memref<8x128xf32, #tpu.memory_space<vmem>>, vector<8x128xf32>
    tpu.vector_store %arg4[%c0_7, %c0_8], %10 {strides = array<i32>} : memref<8x128xf32, #tpu.memory_space<vmem>>, vector<8x128xf32>,
    return
  }
  func.func @transform_0(%arg0: i32) -> (i32, i32) {
    %c0_i32 = arith.constant 0 : i32
    %c0_i32_0 = arith.constant 0 : i32
    return %arg0, %c0_i32 : i32, i32
  }
  func.func @transform_1(%arg0: i32) -> (i32, i32) {
    %c0_i32 = arith.constant 0 : i32
    %c0_i32_0 = arith.constant 0 : i32
    %c0_i32_1 = arith.constant 0 : i32
    return %c0_i32, %c0_i32_0 : i32, i32
  }
  func.func @transform_2(%arg0: i32) -> (i32, i32) {
    %c0_i32 = arith.constant 0 : i32
    %c0_i32_0 = arith.constant 0 : i32
    %c0_i32_1 = arith.constant 0 : i32
    return %c0_i32, %c0_i32_0 : i32, i32
  }
  func.func @transform_3(%arg0: i32) -> (i32, i32) {
    %c0_i32 = arith.constant 0 : i32
    %c0_i32_0 = arith.constant 0 : i32
    return %arg0, %c0_i32 : i32, i32
  }
}

</mosaic_0001>

<llo_original>
// kernel: tpu_custom_call.1
$region0: #{tpu_custom_call.1}
  #allocation0 [shape = 'u32[]', space=smem, size = 0x4, offset = 0x4, fixed_abs, tag = 'smem constant byte address 0x4 - core index']
  #allocation1 [shape = 'u32[144,128]{1,0:T(1,128)}', space=vmem, size = 0x12000, scoped, tag = 'internal scratch']
  %s0 = inlined_call_operand.hbm [shape: f32[19,512], index: 0, kind: input, shape index: {}]
  %s1 = inlined_call_operand.hbm [shape: f32[512,128], index: 1, kind: input, shape index: {}]
  %s2 = inlined_call_operand.vmem [shape: f32[1,128], index: 2, kind: input, shape index: {}]
  %s3 = inlined_call_operand.hbm [shape: f32[19,128], index: 3, kind: output, shape index: {}]
  %s4 = sld [smem:[#allocation0]]
  $region53: #{tpu_custom_call.1} parent=0
    _
  %s6 = ssub.s32 1, %s4
  %s7 = scalar_select 0, %s6, %s4
  $region1: #{tpu_custom_call.1} parent=0
    #allocation2 [shape = 'u8[32768]{0}', space=vmem, size = 0x8000, scoped, tag = 'input window, operand 0']
    #allocation3 [shape = 's32[2]{0}', space=sflag, size = 0x8, scoped, tag = 'scoped memory for tpu_custom_call.1']
    #allocation4 [shape = 's32[2]{0}', space=sflag, size = 0x8, scoped, tag = 'scoped memory for tpu_custom_call.1']
    #allocation5 [shape = 'u8[262144]{0}', space=vmem, size = 0x40000, scoped, tag = 'input window, operand 1, single buffered']
    #allocation6 [shape = 's32[1]{0}', space=sflag, size = 0x4, scoped, tag = 'scoped memory for tpu_custom_call.1']
    #allocation7 [shape = 'u8[8192]{0}', space=vmem, size = 0x2000, scoped, tag = 'output window, operand 0']
    %8 = vsyncpa [#allocation3], 0
    %s9 = scalar_lea.sflag [#allocation3], 1
    %10 = vsyncpa %s9, 0
    %11 = vsyncpa [#allocation6], 0
    %12 = vsyncpa [#allocation4], 0
    %s13 = scalar_lea.sflag [#allocation4], 1
    %14 = vsyncpa %s13, 0
    loop: start=0, step=1, limit=5
    $region2: #{tpu_custom_call.1} parent=1 // loop_pre_header
      _
    $region3: #{tpu_custom_call.1} parent=1 // loop_header
      %s16 = sphi 0, %s20
      %p17 = scmp.ge.s32.totalorder %s16, 5
      %s26 = sphi 0, %s28
      %s29 = sphi 0, %s26
      %s30 = sphi 0, %s29
      %s46 = sphi 0, %s30
      %s50 = sphi 0, %s50
      %s52 = sphi 0, %s50
      %s53 = sphi 0, %s52
      %s67 = sphi 0, %s53
      %s71 = sphi 0, %s71
      %s73 = sphi 0, %s71
      %s74 = sphi 0, %s73
      %s88 = sphi 0, %s74
      %s94 = sphi 0, %s96
      %s97 = sphi 0, %s94
      %s98 = sphi 0, %s97
      %s114 = sphi 0, %s98
    $region4: #{tpu_custom_call.1} parent=1 // loop_header_branch
      %19 = sbr.rel (%p17) target = $region8
    $region5: #{tpu_custom_call.1} parent=1 // loop_body
      %s21 = ssub.s32 %s16, 1
      %s22 = ssub.s32 %s16, 2
      %s23 = sadd.s32 %s16, 1
      %s24 = ssub.s32 %s16, %s23
      %p25 = scmp.eq.s32.totalorder %s24, 0
      %s27 = sadd.s32 %s26, 1
      %s28 = scalar_select %p25, %s26, %s27
      %p31 = pneg %p25
      %p32 = scmp.eq.s32.totalorder %s16, 2
      %p33 = por %p31, %p32
      %p34 = scmp.ne.s32.totalorder %s26, %s29
      %p35 = scmp.eq.s32.totalorder %s16, 0
      %p36 = por %p34, %p35
      %p37 = scmp.ne.s32.totalorder %s26, %s29
      %p38 = scmp.eq.s32.totalorder %s21, 2
      %p39 = por %p37, %p38
      %p40 = scmp.ne.s32.totalorder %s29, %s30
      %p41 = scmp.eq.s32.totalorder %s21, 0
      %p42 = por %p40, %p41
      %p43 = scmp.ne.s32.totalorder %s29, %s30
      %p44 = scmp.eq.s32.totalorder %s22, 2
      %p45 = por %p43, %p44
      %p47 = scmp.ne.s32.totalorder %s30, %s46
      %p48 = scmp.eq.s32.totalorder %s22, 0
      %p49 = por %p47, %p48
      %s51 = sadd.s32 %s50, 1
      %p54 = scmp.eq.s32.totalorder %s16, 2
      %p55 = scmp.ne.s32.totalorder %s50, %s52
      %p56 = scmp.eq.s32.totalorder %s16, 0
      %p57 = por %p55, %p56
      %p58 = scmp.ne.s32.totalorder %s50, %s52
      %p59 = scmp.eq.s32.totalorder %s21, 2
      %p60 = por %p58, %p59
      %p61 = scmp.ne.s32.totalorder %s52, %s53
      %p62 = scmp.eq.s32.totalorder %s21, 0
      %p63 = por %p61, %p62
      %p64 = scmp.ne.s32.totalorder %s52, %s53
      %p65 = scmp.eq.s32.totalorder %s22, 2
      %p66 = por %p64, %p65
      %p68 = scmp.ne.s32.totalorder %s53, %s67
      %p69 = scmp.eq.s32.totalorder %s22, 0
      %p70 = por %p68, %p69
      %s72 = sadd.s32 %s71, 1
      %p75 = scmp.eq.s32.totalorder %s16, 2
      %p76 = scmp.ne.s32.totalorder %s71, %s73
      %p77 = scmp.eq.s32.totalorder %s16, 0
      %p78 = por %p76, %p77
      %p79 = scmp.ne.s32.totalorder %s71, %s73
      %p80 = scmp.eq.s32.totalorder %s21, 2
      %p81 = por %p79, %p80
      %p82 = scmp.ne.s32.totalorder %s73, %s74
      %p83 = scmp.eq.s32.totalorder %s21, 0
      %p84 = por %p82, %p83
      %p85 = scmp.ne.s32.totalorder %s73, %s74
      %p86 = scmp.eq.s32.totalorder %s22, 2
      %p87 = por %p85, %p86
      %p89 = scmp.ne.s32.totalorder %s74, %s88
      %p90 = scmp.eq.s32.totalorder %s22, 0
      %p91 = por %p89, %p90
      %s92 = ssub.s32 %s16, %s23
      %p93 = scmp.eq.s32.totalorder %s92, 0
      %s95 = sadd.s32 %s94, 1
      %s96 = scalar_select %p93, %s94, %s95
      %p99 = pneg %p93
      %p100 = scmp.eq.s32.totalorder %s16, 2
      %p101 = por %p99, %p100
      %p102 = scmp.ne.s32.totalorder %s94, %s97
      %p103 = scmp.eq.s32.totalorder %s16, 0
      %p104 = por %p102, %p103
      %p105 = scmp.ne.s32.totalorder %s94, %s97
      %p106 = scmp.eq.s32.totalorder %s21, 2
      %p107 = por %p105, %p106
      %p108 = scmp.ne.s32.totalorder %s97, %s98
      %p109 = scmp.eq.s32.totalorder %s21, 0
      %p110 = por %p108, %p109
      %p111 = scmp.ne.s32.totalorder %s97, %s98
      %p112 = scmp.eq.s32.totalorder %s22, 2
      %p113 = por %p111, %p112
      %p115 = scmp.ne.s32.totalorder %s98, %s114
      %p116 = scmp.eq.s32.totalorder %s22, 0
      %p117 = por %p115, %p116
      %p118 = scmp.le.s32.totalorder 1, %s16
      %p119 = scmp.lt.s32.totalorder %s16, 4
      %p120 = pnand %p118, %p119
      %p121 = pneg %p120
      // Predicated region
      $region9: #{tpu_custom_call.1} parent=5 // pred_check
        _
      $region10: #{tpu_custom_call.1} parent=5 // pred_check_branch
        %123 = sbr.rel (%p120) target = $region12
      $region11: #{tpu_custom_call.1} parent=5 // pred_region
        %s124 = ssub.s32 %s16, 1
        // Predicated region
        $region13: #{tpu_custom_call.1} parent=11 // pred_check
          %p125 = pneg %p63
        $region14: #{tpu_custom_call.1} parent=11 // pred_check_branch
          %127 = sbr.rel (%p125) target = $region16
        $region15: #{tpu_custom_call.1} parent=11 // pred_region
          %s129 = ssub.s32 8192, 8192
          %130 = vsyncadd [#allocation6], %s129
          %s131 = sshll.u32 [#allocation5], 4
          %s132 = int_to_ptr.vmem [resolvable:$true] %s131
          %137 = dma.hbm_to_vmem [thread:$0]  %s1, 8192, %s132, [#allocation6], 128, 128, 8
        $region16: #{tpu_custom_call.1} parent=11 // pred_fallthru
          _
        // Predicated region
        $region17: #{tpu_custom_call.1} parent=11 // pred_check
          %p138 = pneg %p84
        $region18: #{tpu_custom_call.1} parent=11 // pred_check_branch
          %140 = sbr.rel (%p138) target = $region20
        $region19: #{tpu_custom_call.1} parent=11 // pred_region
          _
        $region20: #{tpu_custom_call.1} parent=11 // pred_fallthru
          _
      $region12: #{tpu_custom_call.1} parent=5 // pred_fallthru
        _
      %p141 = scmp.lt.s32.totalorder %s16, 3
      // Predicated region
      $region21: #{tpu_custom_call.1} parent=5 // pred_check
        %p142 = pneg %p141
      $region22: #{tpu_custom_call.1} parent=5 // pred_check_branch
        %144 = sbr.rel (%p142) target = $region24
      $region23: #{tpu_custom_call.1} parent=5 // pred_region
        // Predicated region
        $region25: #{tpu_custom_call.1} parent=23 // pred_check
          %p145 = pneg %p36
        $region26: #{tpu_custom_call.1} parent=23 // pred_check_branch
          %147 = sbr.rel (%p145) target = $region28
        $region27: #{tpu_custom_call.1} parent=23 // pred_region
          %s148 = sand.u32 %s26, 1
          %s149 = scalar_lea.sflag [#allocation3], %s148
          %s150 = sand.u32 %s26, 1
          %s151 = smul.addr %s150, 32
          %s152 = scalar_lea.vmem [#allocation2], %s151
          %s154 = ssub.s32 512, 512
          %155 = vsyncadd %s149, %s154
          %s156 = smul.addr %s16, 4
          %s157 = smul.addr %s156, 128
          %s158 = scalar_lea.hbm %s0, %s157
          %s160 = sshll.u32 %s152, 4
          %s161 = int_to_ptr.vmem [resolvable:$true] %s160
          %163 = dma.hbm_to_vmem [thread:$0]  %s158, 512, %s161, %s149
        $region28: #{tpu_custom_call.1} parent=23 // pred_fallthru
          _
      $region24: #{tpu_custom_call.1} parent=5 // pred_fallthru
        _
      %p164 = scmp.le.s32.totalorder 1, %s16
      %p165 = scmp.lt.s32.totalorder %s16, 4
      %p166 = pnand %p164, %p165
      %p167 = pneg %p166
      // Predicated region
      $region29: #{tpu_custom_call.1} parent=5 // pred_check
        _
      $region30: #{tpu_custom_call.1} parent=5 // pred_check_branch
        %169 = sbr.rel (%p166) target = $region32
      $region31: #{tpu_custom_call.1} parent=5 // pred_region
        %s170 = ssub.s32 %s16, 1
        %s171 = sand.u32 %s29, 1
        %s172 = scalar_lea.sflag [#allocation3], %s171
        %s173 = sand.u32 %s29, 1
        %s174 = smul.addr %s173, 32
        %s175 = scalar_lea.vmem [#allocation2], %s174
        // Predicated region
        $region33: #{tpu_custom_call.1} parent=31 // pred_check
          %p176 = pneg %p42
        $region34: #{tpu_custom_call.1} parent=31 // pred_check_branch
          %178 = sbr.rel (%p176) target = $region36
        $region35: #{tpu_custom_call.1} parent=31 // pred_region
          %179 = dma.done %s172, 512
        $region36: #{tpu_custom_call.1} parent=31 // pred_fallthru
          _
        // Predicated region
        $region37: #{tpu_custom_call.1} parent=31 // pred_check
          %p180 = pneg %p63
        $region38: #{tpu_custom_call.1} parent=31 // pred_check_branch
          %182 = sbr.rel (%p180) target = $region40
        $region39: #{tpu_custom_call.1} parent=31 // pred_region
          %183 = dma.done [#allocation6], 8192
        $region40: #{tpu_custom_call.1} parent=31 // pred_fallthru
          _
        %s184 = sand.u32 %s29, 1
        %s185 = scalar_lea.sflag [#allocation3], %s184
        %s186 = sand.u32 %s29, 1
        %s187 = smul.addr %s186, 32
        %s188 = scalar_lea.vmem [#allocation2], %s187
        %p189 = pneg %p42
        %p190 = pneg %p39
        %p191 = pneg %p63
        %p192 = pneg %p60
        %p193 = pneg %p84
        %p194 = pneg %p81
        %p195 = pneg %p110
        %p196 = pneg %p107
        %s197 = sand.u32 %s97, 1
        %s198 = scalar_lea.sflag [#allocation4], %s197
        %s199 = sand.u32 %s97, 1
        %s200 = smul.addr %s199, 8
        %s201 = scalar_lea.vmem [#allocation7], %s200
        %v202 = vld [vmem:[%s175] sm:$0xff]
        %v203 = vld [vmem:[%s175 + $0x8] sm:$0xff]
        %v204 = vld [vmem:[%s175 + $0x10] sm:$0xff]
        %v205 = vld [vmem:[%s175 + $0x18] sm:$0xff]
        %v206 = vld [vmem:[#allocation5] sm:$0xff]
        %v207 = vld [vmem:[#allocation5 + $0x8] sm:$0xff]
        %v208 = vld [vmem:[#allocation5 + $0x10] sm:$0xff]
        %v209 = vld [vmem:[#allocation5 + $0x18] sm:$0xff]
        %v210 = vld [vmem:[#allocation5 + $0x20] sm:$0xff]
        %v211 = vld [vmem:[#allocation5 + $0x28] sm:$0xff]
        %v212 = vld [vmem:[#allocation5 + $0x30] sm:$0xff]
        %v213 = vld [vmem:[#allocation5 + $0x38] sm:$0xff]
        %v214 = vld [vmem:[#allocation5 + $0x40] sm:$0xff]
        %v215 = vld [vmem:[#allocation5 + $0x48] sm:$0xff]
        %v216 = vld [vmem:[#allocation5 + $0x50] sm:$0xff]
        %v217 = vld [vmem:[#allocation5 + $0x58] sm:$0xff]
        %v218 = vld [vmem:[#allocation5 + $0x60] sm:$0xff]
        %v219 = vld [vmem:[#allocation5 + $0x68] sm:$0xff]
        %v220 = vld [vmem:[#allocation5 + $0x70] sm:$0xff]
        %v221 = vld [vmem:[#allocation5 + $0x78] sm:$0xff]
        %v222 = vld [vmem:[#allocation5 + $0x80] sm:$0xff]
        %v223 = vld [vmem:[#allocation5 + $0x88] sm:$0xff]
        %v224 = vld [vmem:[#allocation5 + $0x90] sm:$0xff]
        %v225 = vld [vmem:[#allocation5 + $0x98] sm:$0xff]
        %v226 = vld [vmem:[#allocation5 + $0xa0] sm:$0xff]
        %v227 = vld [vmem:[#allocation5 + $0xa8] sm:$0xff]
        %v228 = vld [vmem:[#allocation5 + $0xb0] sm:$0xff]
        %v229 = vld [vmem:[#allocation5 + $0xb8] sm:$0xff]
        %v230 = vld [vmem:[#allocation5 + $0xc0] sm:$0xff]
        %v231 = vld [vmem:[#allocation5 + $0xc8] sm:$0xff]
        %v232 = vld [vmem:[#allocation5 + $0xd0] sm:$0xff]
        %v233 = vld [vmem:[#allocation5 + $0xd8] sm:$0xff]
        %v234 = vld [vmem:[#allocation5 + $0xe0] sm:$0xff]
        %v235 = vld [vmem:[#allocation5 + $0xe8] sm:$0xff]
        %v236 = vld [vmem:[#allocation5 + $0xf0] sm:$0xff]
        %v237 = vld [vmem:[#allocation5 + $0xf8] sm:$0xff]
        %v238 = vld [vmem:[#allocation5 + $0x100] sm:$0xff]
        %v239 = vld [vmem:[#allocation5 + $0x108] sm:$0xff]
        %v240 = vld [vmem:[#allocation5 + $0x110] sm:$0xff]
        %v241 = vld [vmem:[#allocation5 + $0x118] sm:$0xff]
        %v242 = vld [vmem:[#allocation5 + $0x120] sm:$0xff]
        %v243 = vld [vmem:[#allocation5 + $0x128] sm:$0xff]
        %v244 = vld [vmem:[#allocation5 + $0x130] sm:$0xff]
        %v245 = vld [vmem:[#allocation5 + $0x138] sm:$0xff]
        %v246 = vld [vmem:[#allocation5 + $0x140] sm:$0xff]
        %v247 = vld [vmem:[#allocation5 + $0x148] sm:$0xff]
        %v248 = vld [vmem:[#allocation5 + $0x150] sm:$0xff]
        %v249 = vld [vmem:[#allocation5 + $0x158] sm:$0xff]
        %v250 = vld [vmem:[#allocation5 + $0x160] sm:$0xff]
        %v251 = vld [vmem:[#allocation5 + $0x168] sm:$0xff]
        %v252 = vld [vmem:[#allocation5 + $0x170] sm:$0xff]
        %v253 = vld [vmem:[#allocation5 + $0x178] sm:$0xff]
        %v254 = vld [vmem:[#allocation5 + $0x180] sm:$0xff]
        %v255 = vld [vmem:[#allocation5 + $0x188] sm:$0xff]
        %v256 = vld [vmem:[#allocation5 + $0x190] sm:$0xff]
        %v257 = vld [vmem:[#allocation5 + $0x198] sm:$0xff]
        %v258 = vld [vmem:[#allocation5 + $0x1a0] sm:$0xff]
        %v259 = vld [vmem:[#allocation5 + $0x1a8] sm:$0xff]
        %v260 = vld [vmem:[#allocation5 + $0x1b0] sm:$0xff]
        %v261 = vld [vmem:[#allocation5 + $0x1b8] sm:$0xff]
        %v262 = vld [vmem:[#allocation5 + $0x1c0] sm:$0xff]
        %v263 = vld [vmem:[#allocation5 + $0x1c8] sm:$0xff]
        %v264 = vld [vmem:[#allocation5 + $0x1d0] sm:$0xff]
        %v265 = vld [vmem:[#allocation5 + $0x1d8] sm:$0xff]
        %v266 = vld [vmem:[#allocation5 + $0x1e0] sm:$0xff]
        %v267 = vld [vmem:[#allocation5 + $0x1e8] sm:$0xff]
        %v268 = vld [vmem:[#allocation5 + $0x1f0] sm:$0xff]
        %v269 = vld [vmem:[#allocation5 + $0x1f8] sm:$0xff]
        %v270 = vld [vmem:[%s2] sm:$0x1]
        %v272 = vlaneseq
        %v273 = vshrl.u32 %v272, 7
        %v274 = vsub.s32 0, %v273
        %v275 = vrot.slane %v270, %v274
        %277 = vmatprep.subr.mxu0 0.0
        %278 = vmatpush1.msra.mxu0 %v206
        %279 = vmatprep.subr.mxu0 0.0
        %280 = vmatpush1.msra.mxu0 %v207
        %281 = vmatprep.subr.mxu0 0.0
        %282 = vmatpush1.msra.mxu0 %v208
        %283 = vmatprep.subr.mxu0 0.0
        %284 = vmatpush1.msra.mxu0 %v209
        %285 = vmatprep.subr.mxu0 0.0
        %286 = vmatpush1.msra.mxu0 %v210
        %287 = vmatprep.subr.mxu0 0.0
        %288 = vmatpush1.msra.mxu0 %v211
        %289 = vmatprep.subr.mxu0 0.0
        %290 = vmatpush1.msra.mxu0 %v212
        %291 = vmatprep.subr.mxu0 0.0
        %292 = vmatpush1.msra.mxu0 %v213
        %293 = vmatprep.subr.mxu0 0.0
        %294 = vmatpush1.msra.mxu0 %v214
        %295 = vmatprep.subr.mxu0 0.0
        %296 = vmatpush1.msra.mxu0 %v215
        %297 = vmatprep.subr.mxu0 0.0
        %298 = vmatpush1.msra.mxu0 %v216
        %299 = vmatprep.subr.mxu0 0.0
        %300 = vmatpush1.msra.mxu0 %v217
        %301 = vmatprep.subr.mxu0 0.0
        %302 = vmatpush1.msra.mxu0 %v218
        %303 = vmatprep.subr.mxu0 0.0
        %304 = vmatpush1.msra.mxu0 %v219
        %305 = vmatprep.subr.mxu0 0.0
        %306 = vmatpush1.msra.mxu0 %v220
        %307 = vmatprep.subr.mxu0 0.0
        %308 = vmatpush1.msra.mxu0 %v221
        %309 = vmatprep.subr.mxu0 0.0
        %310 = vmatpush1.msra.mxu0 %v222
        %311 = vmatprep.subr.mxu0 0.0
        %312 = vmatpush1.msra.mxu0 %v223
        %313 = vmatprep.subr.mxu0 0.0
        %314 = vmatpush1.msra.mxu0 %v224
        %315 = vmatprep.subr.mxu0 0.0
        %316 = vmatpush1.msra.mxu0 %v225
        %317 = vmatprep.subr.mxu0 0.0
        %318 = vmatpush1.msra.mxu0 %v226
        %319 = vmatprep.subr.mxu0 0.0
        %320 = vmatpush1.msra.mxu0 %v227
        %321 = vmatprep.subr.mxu0 0.0
        %322 = vmatpush1.msra.mxu0 %v228
        %323 = vmatprep.subr.mxu0 0.0
        %324 = vmatpush1.msra.mxu0 %v229
        %325 = vmatprep.subr.mxu0 0.0
        %326 = vmatpush1.msra.mxu0 %v230
        %327 = vmatprep.subr.mxu0 0.0
        %328 = vmatpush1.msra.mxu0 %v231
        %329 = vmatprep.subr.mxu0 0.0
        %330 = vmatpush1.msra.mxu0 %v232
        %331 = vmatprep.subr.mxu0 0.0
        %332 = vmatpush1.msra.mxu0 %v233
        %333 = vmatprep.subr.mxu0 0.0
        %334 = vmatpush1.msra.mxu0 %v234
        %335 = vmatprep.subr.mxu0 0.0
        %336 = vmatpush1.msra.mxu0 %v235
        %337 = vmatprep.subr.mxu0 0.0
        %338 = vmatpush1.msra.mxu0 %v236
        %339 = vmatprep.subr.mxu0 0.0
        %340 = vmatpush1.msra.mxu0 %v237
        %341 = vmatprep.mubr.f32.mxu0 %v203
        %342 = vmatmul.mubr.f32.gmra.mrb[0].mxu0 %v202
        %v343 = vpop.f32.mrb[0].mxu0
        %v344 = vadd.f32 %v275, %v343
        %v345 = vpop.f32.mrb[0].mxu0
        %346 = vdwg.mxu0
        %347 = vmatprep.subr.mxu0 0.0
        %348 = vmatpush1.msra.mxu0 %v238
        %349 = vmatprep.subr.mxu0 0.0
        %350 = vmatpush1.msra.mxu0 %v239
        %351 = vmatprep.subr.mxu0 0.0
        %352 = vmatpush1.msra.mxu0 %v240
        %353 = vmatprep.subr.mxu0 0.0
        %354 = vmatpush1.msra.mxu0 %v241
        %355 = vmatprep.subr.mxu0 0.0
        %356 = vmatpush1.msra.mxu0 %v242
        %357 = vmatprep.subr.mxu0 0.0
        %358 = vmatpush1.msra.mxu0 %v243
        %359 = vmatprep.subr.mxu0 0.0
        %360 = vmatpush1.msra.mxu0 %v244
        %361 = vmatprep.subr.mxu0 0.0
        %362 = vmatpush1.msra.mxu0 %v245
        %363 = vmatprep.subr.mxu0 0.0
        %364 = vmatpush1.msra.mxu0 %v246
        %365 = vmatprep.subr.mxu0 0.0
        %366 = vmatpush1.msra.mxu0 %v247
        %367 = vmatprep.subr.mxu0 0.0
        %368 = vmatpush1.msra.mxu0 %v248
        %369 = vmatprep.subr.mxu0 0.0
        %370 = vmatpush1.msra.mxu0 %v249
        %371 = vmatprep.subr.mxu0 0.0
        %372 = vmatpush1.msra.mxu0 %v250
        %373 = vmatprep.subr.mxu0 0.0
        %374 = vmatpush1.msra.mxu0 %v251
        %375 = vmatprep.subr.mxu0 0.0
        %376 = vmatpush1.msra.mxu0 %v252
        %377 = vmatprep.subr.mxu0 0.0
        %378 = vmatpush1.msra.mxu0 %v253
        %379 = vmatprep.subr.mxu0 0.0
        %380 = vmatpush1.msra.mxu0 %v254
        %381 = vmatprep.subr.mxu0 0.0
        %382 = vmatpush1.msra.mxu0 %v255
        %383 = vmatprep.subr.mxu0 0.0
        %384 = vmatpush1.msra.mxu0 %v256
        %385 = vmatprep.subr.mxu0 0.0
        %386 = vmatpush1.msra.mxu0 %v257
        %387 = vmatprep.subr.mxu0 0.0
        %388 = vmatpush1.msra.mxu0 %v258
        %389 = vmatprep.subr.mxu0 0.0
        %390 = vmatpush1.msra.mxu0 %v259
        %391 = vmatprep.subr.mxu0 0.0
        %392 = vmatpush1.msra.mxu0 %v260
        %393 = vmatprep.subr.mxu0 0.0
        %394 = vmatpush1.msra.mxu0 %v261
        %395 = vmatprep.subr.mxu0 0.0
        %396 = vmatpush1.msra.mxu0 %v262
        %397 = vmatprep.subr.mxu0 0.0
        %398 = vmatpush1.msra.mxu0 %v263
        %399 = vmatprep.subr.mxu0 0.0
        %400 = vmatpush1.msra.mxu0 %v264
        %401 = vmatprep.subr.mxu0 0.0
        %402 = vmatpush1.msra.mxu0 %v265
        %403 = vmatprep.subr.mxu0 0.0
        %404 = vmatpush1.msra.mxu0 %v266
        %405 = vmatprep.subr.mxu0 0.0
        %406 = vmatpush1.msra.mxu0 %v267
        %407 = vmatprep.subr.mxu0 0.0
        %408 = vmatpush1.msra.mxu0 %v268
        %409 = vmatprep.subr.mxu0 0.0
        %410 = vmatpush1.msra.mxu0 %v269
        %411 = vmatprep.mubr.f32.mxu0 %v205
        %412 = vmatmul.mubr.f32.gmra.mrb[0].mxu0 %v204
        %v413 = vpop.f32.mrb[0].mxu0
        %v414 = vadd.f32 %v344, %v413
        %v415 = vpop.f32.mrb[0].mxu0
        %416 = vdwg.mxu0
        %v417 = vmul.f32 %v414, 1000.0
        %v418 = vround.ne.pseudo %v417
        %v419 = vrcp.pop 1000.0
        %v420 = vmul.f32 %v418, %v419
        %421 = vst [vmem:[%s201] sm:$0xff] %v420
        %s422 = sand.u32 %s97, 1
        %s423 = scalar_lea.sflag [#allocation4], %s422
        %s424 = sand.u32 %s97, 1
        %s425 = smul.addr %s424, 8
        %s426 = scalar_lea.vmem [#allocation7], %s425
        // Predicated region
        $region41: #{tpu_custom_call.1} parent=31 // pred_check
          %p427 = pneg %p107
        $region42: #{tpu_custom_call.1} parent=31 // pred_check_branch
          %429 = sbr.rel (%p427) target = $region44
        $region43: #{tpu_custom_call.1} parent=31 // pred_region
          %s431 = ssub.s32 128, 128
          %432 = vsyncadd %s423, %s431
          %s433 = smul.addr %s21, 128
          %s434 = scalar_lea.hbm %s3, %s433
          %s436 = sshll.u32 %s426, 4
          %s437 = int_to_ptr.vmem [resolvable:$true] %s436
          %439 = dma.vmem_to_hbm [thread:$0]  %s437, 128, %s434, %s423
        $region44: #{tpu_custom_call.1} parent=31 // pred_fallthru
          _
      $region32: #{tpu_custom_call.1} parent=5 // pred_fallthru
        _
      %p440 = scmp.le.s32.totalorder 2, %s16
      // Predicated region
      $region45: #{tpu_custom_call.1} parent=5 // pred_check
        %p441 = pneg %p440
      $region46: #{tpu_custom_call.1} parent=5 // pred_check_branch
        %443 = sbr.rel (%p441) target = $region48
      $region47: #{tpu_custom_call.1} parent=5 // pred_region
        %s444 = ssub.s32 %s16, 2
        // Predicated region
        $region49: #{tpu_custom_call.1} parent=47 // pred_check
          %p445 = pneg %p113
        $region50: #{tpu_custom_call.1} parent=47 // pred_check_branch
          %447 = sbr.rel (%p445) target = $region52
        $region51: #{tpu_custom_call.1} parent=47 // pred_region
          %s448 = sand.u32 %s98, 1
          %s449 = scalar_lea.sflag [#allocation4], %s448
          %s450 = sand.u32 %s98, 1
          %s451 = smul.addr %s450, 8
          %s452 = scalar_lea.vmem [#allocation7], %s451
          %453 = dma.done %s449, 128
        $region52: #{tpu_custom_call.1} parent=47 // pred_fallthru
          _
      $region48: #{tpu_custom_call.1} parent=5 // pred_fallthru
        _
    $region6: #{tpu_custom_call.1} parent=1 // loop_footer
      %s20 = sadd.s32 1, %s16
    $region7: #{tpu_custom_call.1} parent=1 // loop_footer_branch
      %15 = sbr.rel target = $region3
    $region8: #{tpu_custom_call.1} parent=1 // loop_exit
      _
    %454 = vsyncpa [#allocation3], 1
    %s455 = scalar_lea.sflag [#allocation3], 1
    %456 = vsyncpa %s455, 1
    %457 = vsyncpa [#allocation6], 1
    %458 = vsyncpa [#allocation4], 1
    %s459 = scalar_lea.sflag [#allocation4], 1
    %460 = vsyncpa %s459, 1

</llo_original>
